<compile_context>
chip_gen: v6e
topology: v6e:2x2x1
jax: 0.10.0
libtpu: 0.0.40
codegen_flags: <defaults>
</compile_context>

<pallas_src>
import functools

import jax
import jax.numpy as jnp
from jax.experimental import pallas as pl
from jax.experimental.pallas import tpu as pltpu


def _round_up(n, m):
    return ((n + m - 1) // m) * m


def _mlp_kernel(x_ref,
                w1_ref, b1_ref,
                w2_ref, b2_ref,
                w3_ref, b3_ref,
                w45_ref, b45_ref,
                o_ref):
    """Fused MLP forward: (lin1+relu) -> (lin2+relu) -> (lin3+relu) -> folded lin4@lin5."""
    x = x_ref[...].astype(jnp.bfloat16)  # (tb, 103), cast in-kernel (no wrapper pre-pass)

    h = jnp.dot(x, w1_ref[...], preferred_element_type=jnp.float32) + b1_ref[...]
    h = jnp.maximum(h, 0.0).astype(jnp.bfloat16)

    h = jnp.dot(h, w2_ref[...], preferred_element_type=jnp.float32) + b2_ref[...]
    h = jnp.maximum(h, 0.0).astype(jnp.bfloat16)

    h = jnp.dot(h, w3_ref[...], preferred_element_type=jnp.float32) + b3_ref[...]
    h = jnp.maximum(h, 0.0).astype(jnp.bfloat16)

    # NOTE: PyTorch forward has NO ReLU after lin4; lin4->lin5 is folded into w45/b45.
    h = jnp.dot(h, w45_ref[...], preferred_element_type=jnp.float32) + b45_ref[...]

    o_ref[...] = h.astype(o_ref.dtype)


def prepare_params(params):
    """Fold lin4/lin5 (in f32), cast weights to bf16 (biases stay f32). No padding."""
    w45 = params["w4"] @ params["w5"]                    # (128, 19)
    b45 = params["b4"] @ params["w5"] + params["b5"]     # (1, 19)
    return {
        "w1": params["w1"].astype(jnp.bfloat16), "b1": params["b1"].astype(jnp.float32),
        "w2": params["w2"].astype(jnp.bfloat16), "b2": params["b2"].astype(jnp.float32),
        "w3": params["w3"].astype(jnp.bfloat16), "b3": params["b3"].astype(jnp.float32),
        "w45": w45.astype(jnp.bfloat16), "b45": b45.astype(jnp.float32),
    }


@functools.partial(jax.jit, static_argnames=("tile_b",))
def _bc_mlp_call(x, w1, b1, w2, b2, w3, b3, w45, b45, *, tile_b):
    B, K = x.shape          # (B, 103)
    N = w45.shape[1]        # 19

    # Batch tile: for B > 8 always split into >= 2 tiles (v7x megacore) while keeping
    # padded rows minimal (v5e MXU-bound); tiny batches use a single full-array block.
    if B <= 8:
        tb = B
    else:
        tb = min(tile_b, _round_up(pl.cdiv(B, 2), 8))
    n_tiles = pl.cdiv(B, tb)

    # Weights/biases: full-array blocks with constant index_map -> DMA'd once,
    # VMEM-resident across all batch tiles.
    # TODO(synk): could add pipeline_mode=pl.Buffered(1) on these constant specs to
    # drop the second (dead) buffer; skipped for lowering robustness.
    def const_spec(shape):
        return pl.BlockSpec(shape, lambda i: (0, 0))

    out = pl.pallas_call(
        _mlp_kernel,
        out_shape=jax.ShapeDtypeStruct((B, N), jnp.float32),
        grid=(n_tiles,),
        in_specs=[
            pl.BlockSpec((tb, K), lambda i: (i, 0)),   # x: batch-tiled, full 103 lanes
            const_spec(w1.shape), const_spec(b1.shape),
            const_spec(w2.shape), const_spec(b2.shape),
            const_spec(w3.shape), const_spec(b3.shape),
            const_spec(w45.shape), const_spec(b45.shape),
        ],
        out_specs=pl.BlockSpec((tb, N), lambda i: (i, 0)),  # narrow (tb, 19) stores
        compiler_params=pltpu.CompilerParams(
            dimension_semantics=("parallel",)),             # shards tiles across v7x TCs
    )(x, w1, b1, w2, b2, w3, b3, w45, b45)

    return out


def bc_mlp_forward(x, prepped, tile_b=2048):
    """Run the fused BC_MLP kernel. x: (B, input_channels) float32 -> (B, output_channels)."""
    return _bc_mlp_call(
        x,
        prepped["w1"], prepped["b1"],
        prepped["w2"], prepped["b2"],
        prepped["w3"], prepped["b3"],
        prepped["w45"], prepped["b45"],
        tile_b=tile_b,
    )


def init_params(key, input_channels=103, output_channels=19):
    """Deterministic init mimicking torch.nn.Linear default (U(-1/sqrt(fan_in), +1/sqrt(fan_in)))."""
    dims = [input_channels, 256, 256, 128, 64, output_channels]
    params = {}
    keys = jax.random.split(key, 2 * (len(dims) - 1))
    for i in range(len(dims) - 1):
        fan_in, fan_out = dims[i], dims[i + 1]
        bound = 1.0 / jnp.sqrt(jnp.float32(fan_in))
        wk, bk = keys[2 * i], keys[2 * i + 1]
        # Stored as (in, out) == transpose of PyTorch's (out, in).
        params[f"w{i+1}"] = jax.random.uniform(
            wk, (fan_in, fan_out), jnp.float32, -bound, bound)
        params[f"b{i+1}"] = jax.random.uniform(
            bk, (1, fan_out), jnp.float32, -bound, bound)
    return params


def reference_forward(x, params):
    """Plain-JAX f32 reference of the PyTorch forward."""
    h = jnp.maximum(x @ params["w1"] + params["b1"], 0.0)
    h = jnp.maximum(h @ params["w2"] + params["b2"], 0.0)
    h = jnp.maximum(h @ params["w3"] + params["b3"], 0.0)
    h = h @ params["w4"] + params["b4"]
    h = h @ params["w5"] + params["b5"]
    return h


if __name__ == "__main__":
    key = jax.random.PRNGKey(0)
    pkey, xkey, xkey2 = jax.random.split(key, 3)

    input_channels, output_channels = 103, 19

    params = init_params(pkey, input_channels, output_channels)
    prepped = prepare_params(params)

    # Small batch: single grid step, block == full array on the batch dim.
    batch = 8
    x = jax.random.normal(xkey, (batch, input_channels), jnp.float32)
    out = jax.block_until_ready(bc_mlp_forward(x, prepped))
    ref = reference_forward(x, params)
    assert out.shape == (batch, output_channels), out.shape
    # bf16 matmul inputs + folded lin4/lin5 -> loosened tolerance vs f32 reference.
    assert jnp.allclose(out, ref, atol=5e-2, rtol=5e-2), "mismatch vs reference (B=8)"

    # Ragged batch: 2 tiles of 152 rows (boundary block masked) -> exercises grid,
    # resident weights, and the narrow (tb, 19) output path.
    batch2 = 300
    x2 = jax.random.normal(xkey2, (batch2, input_channels), jnp.float32)
    out2 = jax.block_until_ready(bc_mlp_forward(x2, prepped))
    ref2 = reference_forward(x2, params)
    assert out2.shape == (batch2, output_channels), out2.shape
    assert jnp.allclose(out2, ref2, atol=5e-2, rtol=5e-2), "mismatch vs reference (B=300)"

    print("KERNEL_OK")
</pallas_src>

<mosaic_0001>
module attributes {stable_mosaic.version = 11 : i64} {
  func.func @_mlp_kernel(%arg0: i32, %arg1: memref<8x103xf32, #tpu.memory_space<vmem>>, %arg2: memref<103x256xbf16, #tpu.memory_space<vmem>>, %arg3: memref<1x256xf32, #tpu.memory_space<vmem>>, %arg4: memref<256x256xbf16, #tpu.memory_space<vmem>>, %arg5: memref<1x256xf32, #tpu.memory_space<vmem>>, %arg6: memref<256x128xbf16, #tpu.memory_space<vmem>>, %arg7: memref<1x128xf32, #tpu.memory_space<vmem>>, %arg8: memref<128x19xbf16, #tpu.memory_space<vmem>>, %arg9: memref<1x19xf32, #tpu.memory_space<vmem>>, %arg10: memref<8x19xf32, #tpu.memory_space<vmem>>) attributes {dimension_semantics = [#tpu.dimension_semantics<parallel>], iteration_bounds = array<i64: 1>, scalar_prefetch = 0 : i64, scratch_operands = 0 : i64, tpu.core_type = #tpu.core_type<tc>, window_params = [{transform_indices = @transform_0, window_bounds = array<i64: 8, 103>}, {pipeline_mode = #tpu.pipeline_mode<synchronous>, transform_indices = @transform_1, window_bounds = array<i64: 103, 256>}, {pipeline_mode = #tpu.pipeline_mode<synchronous>, transform_indices = @transform_2, window_bounds = array<i64: 1, 256>}, {pipeline_mode = #tpu.pipeline_mode<synchronous>, transform_indices = @transform_3, window_bounds = array<i64: 256, 256>}, {pipeline_mode = #tpu.pipeline_mode<synchronous>, transform_indices = @transform_4, window_bounds = array<i64: 1, 256>}, {pipeline_mode = #tpu.pipeline_mode<synchronous>, transform_indices = @transform_5, window_bounds = array<i64: 256, 128>}, {pipeline_mode = #tpu.pipeline_mode<synchronous>, transform_indices = @transform_6, window_bounds = array<i64: 1, 128>}, {pipeline_mode = #tpu.pipeline_mode<synchronous>, transform_indices = @transform_7, window_bounds = array<i64: 128, 19>}, {pipeline_mode = #tpu.pipeline_mode<synchronous>, transform_indices = @transform_8, window_bounds = array<i64: 1, 19>}, {transform_indices = @transform_9, window_bounds = array<i64: 8, 19>}]} {
    %c0 = arith.constant 0 : index
    %c0_0 = arith.constant 0 : index
    %0 = vector.load %arg1[%c0, %c0_0] : memref<8x103xf32, #tpu.memory_space<vmem>>, vector<8x103xf32>
    %1 = arith.truncf %0 : vector<8x103xf32> to vector<8x103xbf16>
    %c0_1 = arith.constant 0 : index
    %c0_2 = arith.constant 0 : index
    %2 = vector.load %arg2[%c0_1, %c0_2] : memref<103x256xbf16, #tpu.memory_space<vmem>>, vector<103x256xbf16>
    %cst = arith.constant dense<0.000000e+00> : vector<8x256xf32>
    %3 = tpu.matmul %1, %2, %cst {dimension_numbers = #tpu.dot_dimension_numbers<[1], [0], [0], [1], [0, 0, 1, 1], [], []>} : vector<8x103xbf16>, vector<103x256xbf16>, vector<8x256xf32> -> vector<8x256xf32>
    %c0_3 = arith.constant 0 : index
    %c0_4 = arith.constant 0 : index
    %4 = vector.load %arg3[%c0_3, %c0_4] : memref<1x256xf32, #tpu.memory_space<vmem>>, vector<1x256xf32>
    %5 = vector.broadcast %4 : vector<1x256xf32> to vector<8x256xf32>
    %6 = arith.addf %3, %5 : vector<8x256xf32>
    %cst_5 = arith.constant 0.000000e+00 : f32
    %7 = vector.broadcast %cst_5 : f32 to vector<8x256xf32>
    %8 = arith.maximumf %6, %7 : vector<8x256xf32>
    %9 = arith.truncf %8 : vector<8x256xf32> to vector<8x256xbf16>
    %c0_6 = arith.constant 0 : index
    %c0_7 = arith.constant 0 : index
    %10 = vector.load %arg4[%c0_6, %c0_7] : memref<256x256xbf16, #tpu.memory_space<vmem>>, vector<256x256xbf16>
    %cst_8 = arith.constant dense<0.000000e+00> : vector<8x256xf32>
    %11 = tpu.matmul %9, %10, %cst_8 {dimension_numbers = #tpu.dot_dimension_numbers<[1], [0], [0], [1], [0, 0, 1, 1], [], []>} : vector<8x256xbf16>, vector<256x256xbf16>, vector<8x256xf32> -> vector<8x256xf32>
    %c0_9 = arith.constant 0 : index
    %c0_10 = arith.constant 0 : index
    %12 = vector.load %arg5[%c0_9, %c0_10] : memref<1x256xf32, #tpu.memory_space<vmem>>, vector<1x256xf32>
    %13 = vector.broadcast %12 : vector<1x256xf32> to vector<8x256xf32>
    %14 = arith.addf %11, %13 : vector<8x256xf32>
    %cst_11 = arith.constant 0.000000e+00 : f32
    %15 = vector.broadcast %cst_11 : f32 to vector<8x256xf32>
    %16 = arith.maximumf %14, %15 : vector<8x256xf32>
    %17 = arith.truncf %16 : vector<8x256xf32> to vector<8x256xbf16>
    %c0_12 = arith.constant 0 : index
    %c0_13 = arith.constant 0 : index
    %18 = vector.load %arg6[%c0_12, %c0_13] : memref<256x128xbf16, #tpu.memory_space<vmem>>, vector<256x128xbf16>
    %cst_14 = arith.constant dense<0.000000e+00> : vector<8x128xf32>
    %19 = tpu.matmul %17, %18, %cst_14 {dimension_numbers = #tpu.dot_dimension_numbers<[1], [0], [0], [1], [0, 0, 1, 1], [], []>} : vector<8x256xbf16>, vector<256x128xbf16>, vector<8x128xf32> -> vector<8x128xf32>
    %c0_15 = arith.constant 0 : index
    %c0_16 = arith.constant 0 : index
    %20 = vector.load %arg7[%c0_15, %c0_16] : memref<1x128xf32, #tpu.memory_space<vmem>>, vector<1x128xf32>
    %21 = vector.broadcast %20 : vector<1x128xf32> to vector<8x128xf32>
    %22 = arith.addf %19, %21 : vector<8x128xf32>
    %cst_17 = arith.constant 0.000000e+00 : f32
    %23 = vector.broadcast %cst_17 : f32 to vector<8x128xf32>
    %24 = arith.maximumf %22, %23 : vector<8x128xf32>
    %25 = arith.truncf %24 : vector<8x128xf32> to vector<8x128xbf16>
    %c0_18 = arith.constant 0 : index
    %c0_19 = arith.constant 0 : index
    %26 = vector.load %arg8[%c0_18, %c0_19] : memref<128x19xbf16, #tpu.memory_space<vmem>>, vector<128x19xbf16>
    %cst_20 = arith.constant dense<0.000000e+00> : vector<8x19xf32>
    %27 = tpu.matmul %25, %26, %cst_20 {dimension_numbers = #tpu.dot_dimension_numbers<[1], [0], [0], [1], [0, 0, 1, 1], [], []>} : vector<8x128xbf16>, vector<128x19xbf16>, vector<8x19xf32> -> vector<8x19xf32>
    %c0_21 = arith.constant 0 : index
    %c0_22 = arith.constant 0 : index
    %28 = vector.load %arg9[%c0_21, %c0_22] : memref<1x19xf32, #tpu.memory_space<vmem>>, vector<1x19xf32>
    %29 = vector.broadcast %28 : vector<1x19xf32> to vector<8x19xf32>
    %30 = arith.addf %27, %29 : vector<8x19xf32>
    %c0_23 = arith.constant 0 : index
    %c0_24 = arith.constant 0 : index
    %31 = vector.load %arg10[%c0_23, %c0_24] : memref<8x19xf32, #tpu.memory_space<vmem>>, vector<8x19xf32>
    tpu.vector_store %arg10[%c0_23, %c0_24], %30 {strides = array<i32>} : memref<8x19xf32, #tpu.memory_space<vmem>>, vector<8x19xf32>,
    return
  }
  func.func @transform_0(%arg0: i32) -> (i32, i32) {
    %c0_i32 = arith.constant 0 : i32
    %c0_i32_0 = arith.constant 0 : i32
    return %arg0, %c0_i32 : i32, i32
  }
  func.func @transform_1(%arg0: i32) -> (i32, i32) {
    %c0_i32 = arith.constant 0 : i32
    %c0_i32_0 = arith.constant 0 : i32
    %c0_i32_1 = arith.constant 0 : i32
    return %c0_i32, %c0_i32_0 : i32, i32
  }
  func.func @transform_2(%arg0: i32) -> (i32, i32) {
    %c0_i32 = arith.constant 0 : i32
    %c0_i32_0 = arith.constant 0 : i32
    %c0_i32_1 = arith.constant 0 : i32
    return %c0_i32, %c0_i32_0 : i32, i32
  }
  func.func @transform_3(%arg0: i32) -> (i32, i32) {
    %c0_i32 = arith.constant 0 : i32
    %c0_i32_0 = arith.constant 0 : i32
    %c0_i32_1 = arith.constant 0 : i32
    return %c0_i32, %c0_i32_0 : i32, i32
  }
  func.func @transform_4(%arg0: i32) -> (i32, i32) {
    %c0_i32 = arith.constant 0 : i32
    %c0_i32_0 = arith.constant 0 : i32
    %c0_i32_1 = arith.constant 0 : i32
    return %c0_i32, %c0_i32_0 : i32, i32
  }
  func.func @transform_5(%arg0: i32) -> (i32, i32) {
    %c0_i32 = arith.constant 0 : i32
    %c0_i32_0 = arith.constant 0 : i32
    %c0_i32_1 = arith.constant 0 : i32
    return %c0_i32, %c0_i32_0 : i32, i32
  }
  func.func @transform_6(%arg0: i32) -> (i32, i32) {
    %c0_i32 = arith.constant 0 : i32
    %c0_i32_0 = arith.constant 0 : i32
    %c0_i32_1 = arith.constant 0 : i32
    return %c0_i32, %c0_i32_0 : i32, i32
  }
  func.func @transform_7(%arg0: i32) -> (i32, i32) {
    %c0_i32 = arith.constant 0 : i32
    %c0_i32_0 = arith.constant 0 : i32
    %c0_i32_1 = arith.constant 0 : i32
    return %c0_i32, %c0_i32_0 : i32, i32
  }
  func.func @transform_8(%arg0: i32) -> (i32, i32) {
    %c0_i32 = arith.constant 0 : i32
    %c0_i32_0 = arith.constant 0 : i32
    %c0_i32_1 = arith.constant 0 : i32
    return %c0_i32, %c0_i32_0 : i32, i32
  }
  func.func @transform_9(%arg0: i32) -> (i32, i32) {
    %c0_i32 = arith.constant 0 : i32
    %c0_i32_0 = arith.constant 0 : i32
    return %arg0, %c0_i32 : i32, i32
  }
}

</mosaic_0001>

<llo_original>
// kernel: _bc_mlp_call.1
$region0: #{_bc_mlp_call.1}
  #allocation0 [shape = 'u32[]', space=smem, size = 0x4, offset = 0x4, fixed_abs, tag = 'smem constant byte address 0x4 - core index']
  #allocation1 [shape = 'u32[144,128]{1,0:T(1,128)}', space=vmem, size = 0x12000, scoped, tag = 'internal scratch']
  %s0 = inlined_call_operand.vmem [shape: f32[8,103], index: 0, kind: input, shape index: {}]
  %s1 = inlined_call_operand.hbm [shape: bf16[103,256], index: 1, kind: input, shape index: {}]
  %s2 = inlined_call_operand.vmem [shape: f32[1,256], index: 2, kind: input, shape index: {}]
  %s3 = inlined_call_operand.hbm [shape: bf16[256,256], index: 3, kind: input, shape index: {}]
  %s4 = inlined_call_operand.vmem [shape: f32[1,256], index: 4, kind: input, shape index: {}]
  %s5 = inlined_call_operand.hbm [shape: bf16[256,128], index: 5, kind: input, shape index: {}]
  %s6 = inlined_call_operand.vmem [shape: f32[1,128], index: 6, kind: input, shape index: {}]
  %s7 = inlined_call_operand.vmem [shape: bf16[128,19], index: 7, kind: input, shape index: {}]
  %s8 = inlined_call_operand.vmem [shape: f32[1,19], index: 8, kind: input, shape index: {}]
  %s9 = inlined_call_operand.hbm [shape: f32[8,19], index: 9, kind: output, shape index: {}]
  %s10 = sld [smem:[#allocation0]]
  $region58: #{_bc_mlp_call.1} parent=0
    _
  %s12 = ssub.s32 1, %s10
  %s13 = scalar_select 0, %s12, %s10
  $region1: #{_bc_mlp_call.1} parent=0
    #allocation2 [shape = 'u8[53248]{0}', space=vmem, size = 0xd000, scoped, tag = 'input window, operand 1, single buffered']
    #allocation3 [shape = 's32[1]{0}', space=sflag, size = 0x4, scoped, tag = 'scoped memory for _bc_mlp_call.1']
    #allocation4 [shape = 's32[1]{0}', space=sflag, size = 0x4, scoped, tag = 'scoped memory for _bc_mlp_call.1']
    #allocation5 [shape = 'u8[131072]{0}', space=vmem, size = 0x20000, scoped, tag = 'input window, operand 3, single buffered']
    #allocation6 [shape = 's32[1]{0}', space=sflag, size = 0x4, scoped, tag = 'scoped memory for _bc_mlp_call.1']
    #allocation7 [shape = 'u8[65536]{0}', space=vmem, size = 0x10000, scoped, tag = 'input window, operand 5, single buffered']
    #allocation8 [shape = 'u8[4096]{0}', space=vmem, size = 0x1000, scoped, tag = 'output window, operand 0, single buffered']
    %14 = vsyncpa [#allocation3], 0
    %15 = vsyncpa [#allocation6], 0
    %16 = vsyncpa [#allocation4], 0
    // Predicated region
    $region2: #{_bc_mlp_call.1} parent=1 // pred_check
      _
    $region3: #{_bc_mlp_call.1} parent=1 // pred_check_branch
      %18 = sbr.rel (0) target = $region5
    $region4: #{_bc_mlp_call.1} parent=1 // pred_region
      _
    $region5: #{_bc_mlp_call.1} parent=1 // pred_fallthru
      _
    // Predicated region
    $region6: #{_bc_mlp_call.1} parent=1 // pred_check
      _
    $region7: #{_bc_mlp_call.1} parent=1 // pred_check_branch
      %20 = sbr.rel (0) target = $region9
    $region8: #{_bc_mlp_call.1} parent=1 // pred_region
      %s22 = ssub.s32 1664, 1664
      %23 = vsyncadd [#allocation3], %s22
      %s24 = sshll.u32 [#allocation2], 4
      %s25 = int_to_ptr.vmem [resolvable:$true] %s24
      %30 = dma.hbm_to_vmem [thread:$0]  %s1, 1664, %s25, [#allocation3], 128, 128, 8
    $region9: #{_bc_mlp_call.1} parent=1 // pred_fallthru
      _
    // Predicated region
    $region10: #{_bc_mlp_call.1} parent=1 // pred_check
      _
    $region11: #{_bc_mlp_call.1} parent=1 // pred_check_branch
      %32 = sbr.rel (0) target = $region13
    $region12: #{_bc_mlp_call.1} parent=1 // pred_region
      _
    $region13: #{_bc_mlp_call.1} parent=1 // pred_fallthru
      _
    // Predicated region
    $region14: #{_bc_mlp_call.1} parent=1 // pred_check
      _
    $region15: #{_bc_mlp_call.1} parent=1 // pred_check_branch
      %34 = sbr.rel (0) target = $region17
    $region16: #{_bc_mlp_call.1} parent=1 // pred_region
      %s36 = ssub.s32 4096, 4096
      %37 = vsyncadd [#allocation6], %s36
      %s38 = sshll.u32 [#allocation5], 4
      %s39 = int_to_ptr.vmem [resolvable:$true] %s38
      %44 = dma.hbm_to_vmem [thread:$0]  %s3, 4096, %s39, [#allocation6], 128, 128, 8
    $region17: #{_bc_mlp_call.1} parent=1 // pred_fallthru
      _
    // Predicated region
    $region18: #{_bc_mlp_call.1} parent=1 // pred_check
      _
    $region19: #{_bc_mlp_call.1} parent=1 // pred_check_branch
      %46 = sbr.rel (0) target = $region21
    $region20: #{_bc_mlp_call.1} parent=1 // pred_region
      _
    $region21: #{_bc_mlp_call.1} parent=1 // pred_fallthru
      _
    // Predicated region
    $region22: #{_bc_mlp_call.1} parent=1 // pred_check
      _
    $region23: #{_bc_mlp_call.1} parent=1 // pred_check_branch
      %48 = sbr.rel (0) target = $region25
    $region24: #{_bc_mlp_call.1} parent=1 // pred_region
      %s50 = ssub.s32 2048, 2048
      %51 = vsyncadd [#allocation6], %s50
      %s52 = sshll.u32 [#allocation7], 4
      %s53 = int_to_ptr.vmem [resolvable:$true] %s52
      %58 = dma.hbm_to_vmem [thread:$0]  %s5, 2048, %s53, [#allocation6], 64, 64, 4
    $region25: #{_bc_mlp_call.1} parent=1 // pred_fallthru
      _
    // Predicated region
    $region26: #{_bc_mlp_call.1} parent=1 // pred_check
      _
    $region27: #{_bc_mlp_call.1} parent=1 // pred_check_branch
      %60 = sbr.rel (0) target = $region29
    $region28: #{_bc_mlp_call.1} parent=1 // pred_region
      _
    $region29: #{_bc_mlp_call.1} parent=1 // pred_fallthru
      _
    // Predicated region
    $region30: #{_bc_mlp_call.1} parent=1 // pred_check
      _
    $region31: #{_bc_mlp_call.1} parent=1 // pred_check_branch
      %62 = sbr.rel (0) target = $region33
    $region32: #{_bc_mlp_call.1} parent=1 // pred_region
      _
    $region33: #{_bc_mlp_call.1} parent=1 // pred_fallthru
      _
    // Predicated region
    $region34: #{_bc_mlp_call.1} parent=1 // pred_check
      _
    $region35: #{_bc_mlp_call.1} parent=1 // pred_check_branch
      %64 = sbr.rel (0) target = $region37
    $region36: #{_bc_mlp_call.1} parent=1 // pred_region
      _
    $region37: #{_bc_mlp_call.1} parent=1 // pred_fallthru
      _
    // Predicated region
    $region38: #{_bc_mlp_call.1} parent=1 // pred_check
      _
    $region39: #{_bc_mlp_call.1} parent=1 // pred_check_branch
      %66 = sbr.rel (0) target = $region41
    $region40: #{_bc_mlp_call.1} parent=1 // pred_region
      %67 = dma.done [#allocation3], 1664
    $region41: #{_bc_mlp_call.1} parent=1 // pred_fallthru
      _
    // Predicated region
    $region42: #{_bc_mlp_call.1} parent=1 // pred_check
      _
    $region43: #{_bc_mlp_call.1} parent=1 // pred_check_branch
      %69 = sbr.rel (0) target = $region45
    $region44: #{_bc_mlp_call.1} parent=1 // pred_region
      %70 = dma.done [#allocation6], 4096
    $region45: #{_bc_mlp_call.1} parent=1 // pred_fallthru
      _
    // Predicated region
    $region46: #{_bc_mlp_call.1} parent=1 // pred_check
      _
    $region47: #{_bc_mlp_call.1} parent=1 // pred_check_branch
      %72 = sbr.rel (0) target = $region49
    $region48: #{_bc_mlp_call.1} parent=1 // pred_region
      %73 = dma.done [#allocation6], 2048
    $region49: #{_bc_mlp_call.1} parent=1 // pred_fallthru
      _
    %v75 = vld [vmem:[%s0] sm:$0xff]
    %v76 = vpack.c.bf16 %v75, %v75
    %v77 = vld [vmem:[#allocation2] sm:$0xff]
    %v78 = vld [vmem:[#allocation2 + $0x8] sm:$0xff]
    %v79 = vld [vmem:[#allocation2 + $0x10] sm:$0xff]
    %v80 = vld [vmem:[#allocation2 + $0x18] sm:$0xff]
    %v81 = vld [vmem:[#allocation2 + $0x20] sm:$0xff]
    %v82 = vld [vmem:[#allocation2 + $0x28] sm:$0xff]
    %v83 = vld [vmem:[#allocation2 + $0x30] sm:$0xff]
    %v84 = vld [vmem:[#allocation2 + $0x38] sm:$0xff]
    %v85 = vld [vmem:[#allocation2 + $0x40] sm:$0xff]
    %v86 = vld [vmem:[#allocation2 + $0x48] sm:$0xff]
    %v87 = vld [vmem:[#allocation2 + $0x50] sm:$0xff]
    %v88 = vld [vmem:[#allocation2 + $0x58] sm:$0xff]
    %v89 = vld [vmem:[#allocation2 + $0x60] sm:$0xff]
    %v90 = vld [vmem:[%s2] sm:$0x3]
    %v92 = vlaneseq
    %v93 = vshrl.u32 %v92, 7
    %v94 = vsub.s32 0, %v93
    %v95 = vrot.slane %v90, %v94
    %v96 = vlaneseq
    %v97 = vshrl.u32 %v96, 7
    %v98 = vsub.s32 1, %v97
    %v99 = vrot.slane %v90, %v98
    %v115 = vunpack.c.l.b16 %v77
    %v116 = vunpack.c.h.b16 %v77
    %v117 = vunpack.c.l.b16 %v78
    %v118 = vunpack.c.h.b16 %v78
    %v119 = vunpack.c.l.b16 %v79
    %v120 = vunpack.c.h.b16 %v79
    %v121 = vunpack.c.l.b16 %v80
    %v122 = vunpack.c.h.b16 %v80
    %v123 = vunpack.c.l.b16 %v81
    %v124 = vunpack.c.h.b16 %v81
    %v125 = vunpack.c.l.b16 %v82
    %v126 = vunpack.c.h.b16 %v82
    %v127 = vunpack.c.l.b16 %v83
    %v128 = vunpack.c.h.b16 %v83
    %v129 = vunpack.c.l.b16 %v84
    %v130 = vunpack.c.h.b16 %v84
    %v131 = vunpack.c.l.b16 %v85
    %v132 = vunpack.c.h.b16 %v85
    %v133 = vunpack.c.l.b16 %v86
    %v134 = vunpack.c.h.b16 %v86
    %v135 = vunpack.c.l.b16 %v87
    %v136 = vunpack.c.h.b16 %v87
    %v137 = vunpack.c.l.b16 %v88
    %v138 = vunpack.c.h.b16 %v88
    %v139 = vunpack.c.l.b16 %v89
    %v140 = vunpack.c.h.b16 %v89
    %v141 = vpack.c.b16 %v117, %v115
    %v142 = vpack.c.b16 %v118, %v116
    %v143 = vpack.c.b16 %v121, %v119
    %v144 = vpack.c.b16 %v122, %v120
    %v145 = vpack.c.b16 %v125, %v123
    %v146 = vpack.c.b16 %v126, %v124
    %v147 = vpack.c.b16 %v129, %v127
    %v148 = vpack.c.b16 %v130, %v128
    %v149 = vpack.c.b16 %v133, %v131
    %v150 = vpack.c.b16 %v134, %v132
    %v151 = vpack.c.b16 %v137, %v135
    %v152 = vpack.c.b16 %v138, %v136
    %v153 = vpack.c.b16 %v139, %v139
    %v154 = vpack.c.b16 %v140, %v140
    %vm167 = vcmask 842752
    %v169 = vsel %vm167, %v76, 0
    %vm171 = vcmask 1042432
    %vm172 = vcmask 1043456
    %v173 = vsel %vm171, 4294967295, 65535
    %v174 = vsel %vm172, %v173, 0
    %v176 = vand.u32 %v153, %v174
    %v179 = vand.u32 %v154, %v174
    %181 = vmatprep.subr.bf16.mxu0 0
    %182 = vmatpush1.bf16.msra.mxu0 0
    %183 = vmatprep.subr.bf16.mxu0 %v179
    %184 = vmatpush1.bf16.msra.mxu0 %v176
    %185 = vmatprep.subr.bf16.mxu0 %v152
    %186 = vmatpush1.bf16.msra.mxu0 %v151
    %187 = vmatprep.subr.bf16.mxu0 %v150
    %188 = vmatpush1.bf16.msra.mxu0 %v149
    %189 = vmatprep.subr.bf16.mxu0 %v148
    %190 = vmatpush1.bf16.msra.mxu0 %v147
    %191 = vmatprep.subr.bf16.mxu0 %v146
    %192 = vmatpush1.bf16.msra.mxu0 %v145
    %193 = vmatprep.subr.bf16.mxu0 %v144
    %194 = vmatpush1.bf16.msra.mxu0 %v143
    %195 = vmatprep.subr.bf16.mxu0 %v142
    %196 = vmatpush1.bf16.msra.mxu0 %v141
    %197 = vmatprep.subr.bf16.mxu0 0
    %198 = vmatpush2.bf16.msra.mxu0 0
    %199 = vmatprep.subr.bf16.mxu0 0
    %200 = vmatpush2.bf16.msra.mxu0 0
    %201 = vmatprep.subr.bf16.mxu0 0
    %202 = vmatpush2.bf16.msra.mxu0 0
    %203 = vmatprep.subr.bf16.mxu0 0
    %204 = vmatpush2.bf16.msra.mxu0 0
    %205 = vmatprep.subr.bf16.mxu0 0
    %206 = vmatpush2.bf16.msra.mxu0 0
    %207 = vmatprep.subr.bf16.mxu0 0
    %208 = vmatpush2.bf16.msra.mxu0 0
    %209 = vmatprep.subr.bf16.mxu0 0
    %210 = vmatpush2.bf16.msra.mxu0 0
    %211 = vmatprep.subr.bf16.mxu0 0
    %212 = vmatpush2.bf16.msra.mxu0 0
    %213 = vmatprep.mubr.bf16.mxu0 0
    %214 = vmatmul.mubr.bf16.gmra.mxu0 %v169
    %v215 = vpop.f32.mrf.mxu0
    %v216 = vadd.f32 %v95, %v215
    %v217 = vpop.f32.mrf.mxu0
    %v218 = vadd.f32 %v99, %v217
    %v219 = vpop.f32.mrf.mxu0
    %v220 = vpop.f32.mrf.mxu0
    %221 = vdwg.mxu0
    %v222 = vmax.f32 %v216, 0.0
    %v223 = vmax.f32 %v218, 0.0
    %v224 = vpack.c.bf16 %v222, %v222
    %v225 = vpack.c.bf16 %v223, %v223
    %v226 = vld [vmem:[#allocation5] sm:$0xff]
    %v227 = vld [vmem:[#allocation5 + $0x8] sm:$0xff]
    %v228 = vld [vmem:[#allocation5 + $0x10] sm:$0xff]
    %v229 = vld [vmem:[#allocation5 + $0x18] sm:$0xff]
    %v230 = vld [vmem:[#allocation5 + $0x20] sm:$0xff]
    %v231 = vld [vmem:[#allocation5 + $0x28] sm:$0xff]
    %v232 = vld [vmem:[#allocation5 + $0x30] sm:$0xff]
    %v233 = vld [vmem:[#allocation5 + $0x38] sm:$0xff]
    %v234 = vld [vmem:[#allocation5 + $0x40] sm:$0xff]
    %v235 = vld [vmem:[#allocation5 + $0x48] sm:$0xff]
    %v236 = vld [vmem:[#allocation5 + $0x50] sm:$0xff]
    %v237 = vld [vmem:[#allocation5 + $0x58] sm:$0xff]
    %v238 = vld [vmem:[#allocation5 + $0x60] sm:$0xff]
    %v239 = vld [vmem:[#allocation5 + $0x68] sm:$0xff]
    %v240 = vld [vmem:[#allocation5 + $0x70] sm:$0xff]
    %v241 = vld [vmem:[#allocation5 + $0x78] sm:$0xff]
    %v242 = vld [vmem:[#allocation5 + $0x80] sm:$0xff]
    %v243 = vld [vmem:[#allocation5 + $0x88] sm:$0xff]
    %v244 = vld [vmem:[#allocation5 + $0x90] sm:$0xff]
    %v245 = vld [vmem:[#allocation5 + $0x98] sm:$0xff]
    %v246 = vld [vmem:[#allocation5 + $0xa0] sm:$0xff]
    %v247 = vld [vmem:[#allocation5 + $0xa8] sm:$0xff]
    %v248 = vld [vmem:[#allocation5 + $0xb0] sm:$0xff]
    %v249 = vld [vmem:[#allocation5 + $0xb8] sm:$0xff]
    %v250 = vld [vmem:[#allocation5 + $0xc0] sm:$0xff]
    %v251 = vld [vmem:[#allocation5 + $0xc8] sm:$0xff]
    %v252 = vld [vmem:[#allocation5 + $0xd0] sm:$0xff]
    %v253 = vld [vmem:[#allocation5 + $0xd8] sm:$0xff]
    %v254 = vld [vmem:[#allocation5 + $0xe0] sm:$0xff]
    %v255 = vld [vmem:[#allocation5 + $0xe8] sm:$0xff]
    %v256 = vld [vmem:[#allocation5 + $0xf0] sm:$0xff]
    %v257 = vld [vmem:[#allocation5 + $0xf8] sm:$0xff]
    %v258 = vld [vmem:[%s4] sm:$0x3]
    %v260 = vlaneseq
    %v261 = vshrl.u32 %v260, 7
    %v262 = vsub.s32 0, %v261
    %v263 = vrot.slane %v258, %v262
    %v264 = vlaneseq
    %v265 = vshrl.u32 %v264, 7
    %v266 = vsub.s32 1, %v265
    %v267 = vrot.slane %v258, %v266
    %v302 = vunpack.c.l.b16 %v226
    %v303 = vunpack.c.h.b16 %v226
    %v304 = vunpack.c.l.b16 %v227
    %v305 = vunpack.c.h.b16 %v227
    %v306 = vunpack.c.l.b16 %v228
    %v307 = vunpack.c.h.b16 %v228
    %v308 = vunpack.c.l.b16 %v229
    %v309 = vunpack.c.h.b16 %v229
    %v310 = vunpack.c.l.b16 %v230
    %v311 = vunpack.c.h.b16 %v230
    %v312 = vunpack.c.l.b16 %v231
    %v313 = vunpack.c.h.b16 %v231
    %v314 = vunpack.c.l.b16 %v232
    %v315 = vunpack.c.h.b16 %v232
    %v316 = vunpack.c.l.b16 %v233
    %v317 = vunpack.c.h.b16 %v233
    %v318 = vunpack.c.l.b16 %v234
    %v319 = vunpack.c.h.b16 %v234
    %v320 = vunpack.c.l.b16 %v235
    %v321 = vunpack.c.h.b16 %v235
    %v322 = vunpack.c.l.b16 %v236
    %v323 = vunpack.c.h.b16 %v236
    %v324 = vunpack.c.l.b16 %v237
    %v325 = vunpack.c.h.b16 %v237
    %v326 = vunpack.c.l.b16 %v238
    %v327 = vunpack.c.h.b16 %v238
    %v328 = vunpack.c.l.b16 %v239
    %v329 = vunpack.c.h.b16 %v239
    %v330 = vunpack.c.l.b16 %v240
    %v331 = vunpack.c.h.b16 %v240
    %v332 = vunpack.c.l.b16 %v241
    %v333 = vunpack.c.h.b16 %v241
    %v334 = vunpack.c.l.b16 %v242
    %v335 = vunpack.c.h.b16 %v242
    %v336 = vunpack.c.l.b16 %v243
    %v337 = vunpack.c.h.b16 %v243
    %v338 = vunpack.c.l.b16 %v244
    %v339 = vunpack.c.h.b16 %v244
    %v340 = vunpack.c.l.b16 %v245
    %v341 = vunpack.c.h.b16 %v245
    %v342 = vunpack.c.l.b16 %v246
    %v343 = vunpack.c.h.b16 %v246
    %v344 = vunpack.c.l.b16 %v247
    %v345 = vunpack.c.h.b16 %v247
    %v346 = vunpack.c.l.b16 %v248
    %v347 = vunpack.c.h.b16 %v248
    %v348 = vunpack.c.l.b16 %v249
    %v349 = vunpack.c.h.b16 %v249
    %v350 = vunpack.c.l.b16 %v250
    %v351 = vunpack.c.h.b16 %v250
    %v352 = vunpack.c.l.b16 %v251
    %v353 = vunpack.c.h.b16 %v251
    %v354 = vunpack.c.l.b16 %v252
    %v355 = vunpack.c.h.b16 %v252
    %v356 = vunpack.c.l.b16 %v253
    %v357 = vunpack.c.h.b16 %v253
    %v358 = vunpack.c.l.b16 %v254
    %v359 = vunpack.c.h.b16 %v254
    %v360 = vunpack.c.l.b16 %v255
    %v361 = vunpack.c.h.b16 %v255
    %v362 = vunpack.c.l.b16 %v256
    %v363 = vunpack.c.h.b16 %v256
    %v364 = vunpack.c.l.b16 %v257
    %v365 = vunpack.c.h.b16 %v257
    %v366 = vpack.c.b16 %v304, %v302
    %v367 = vpack.c.b16 %v305, %v303
    %v368 = vpack.c.b16 %v308, %v306
    %v369 = vpack.c.b16 %v309, %v307
    %v370 = vpack.c.b16 %v312, %v310
    %v371 = vpack.c.b16 %v313, %v311
    %v372 = vpack.c.b16 %v316, %v314
    %v373 = vpack.c.b16 %v317, %v315
    %v374 = vpack.c.b16 %v320, %v318
    %v375 = vpack.c.b16 %v321, %v319
    %v376 = vpack.c.b16 %v324, %v322
    %v377 = vpack.c.b16 %v325, %v323
    %v378 = vpack.c.b16 %v328, %v326
    %v379 = vpack.c.b16 %v329, %v327
    %v380 = vpack.c.b16 %v332, %v330
    %v381 = vpack.c.b16 %v333, %v331
    %v382 = vpack.c.b16 %v336, %v334
    %v383 = vpack.c.b16 %v337, %v335
    %v384 = vpack.c.b16 %v340, %v338
    %v385 = vpack.c.b16 %v341, %v339
    %v386 = vpack.c.b16 %v344, %v342
    %v387 = vpack.c.b16 %v345, %v343
    %v388 = vpack.c.b16 %v348, %v346
    %v389 = vpack.c.b16 %v349, %v347
    %v390 = vpack.c.b16 %v352, %v350
    %v391 = vpack.c.b16 %v353, %v351
    %v392 = vpack.c.b16 %v356, %v354
    %v393 = vpack.c.b16 %v357, %v355
    %v394 = vpack.c.b16 %v360, %v358
    %v395 = vpack.c.b16 %v361, %v359
    %v396 = vpack.c.b16 %v364, %v362
    %v397 = vpack.c.b16 %v365, %v363
    %430 = vmatprep.subr.bf16.mxu0 %v381
    %431 = vmatpush1.bf16.msra.mxu0 %v380
    %432 = vmatprep.subr.bf16.mxu0 %v379
    %433 = vmatpush1.bf16.msra.mxu0 %v378
    %434 = vmatprep.subr.bf16.mxu0 %v377
    %435 = vmatpush1.bf16.msra.mxu0 %v376
    %436 = vmatprep.subr.bf16.mxu0 %v375
    %437 = vmatpush1.bf16.msra.mxu0 %v374
    %438 = vmatprep.subr.bf16.mxu0 %v373
    %439 = vmatpush1.bf16.msra.mxu0 %v372
    %440 = vmatprep.subr.bf16.mxu0 %v371
    %441 = vmatpush1.bf16.msra.mxu0 %v370
    %442 = vmatprep.subr.bf16.mxu0 %v369
    %443 = vmatpush1.bf16.msra.mxu0 %v368
    %444 = vmatprep.subr.bf16.mxu0 %v367
    %445 = vmatpush1.bf16.msra.mxu0 %v366
    %446 = vmatprep.subr.bf16.mxu0 %v397
    %447 = vmatpush2.bf16.msra.mxu0 %v396
    %448 = vmatprep.subr.bf16.mxu0 %v395
    %449 = vmatpush2.bf16.msra.mxu0 %v394
    %450 = vmatprep.subr.bf16.mxu0 %v393
    %451 = vmatpush2.bf16.msra.mxu0 %v392
    %452 = vmatprep.subr.bf16.mxu0 %v391
    %453 = vmatpush2.bf16.msra.mxu0 %v390
    %454 = vmatprep.subr.bf16.mxu0 %v389
    %455 = vmatpush2.bf16.msra.mxu0 %v388
    %456 = vmatprep.subr.bf16.mxu0 %v387
    %457 = vmatpush2.bf16.msra.mxu0 %v386
    %458 = vmatprep.subr.bf16.mxu0 %v385
    %459 = vmatpush2.bf16.msra.mxu0 %v384
    %460 = vmatprep.subr.bf16.mxu0 %v383
    %461 = vmatpush2.bf16.msra.mxu0 %v382
    %462 = vmatprep.mubr.bf16.mxu0 %v225
    %463 = vmatmul.mubr.bf16.gmra.mxu0 %v224
    %v464 = vpop.f32.mrf.mxu0
    %v465 = vadd.f32 %v263, %v464
    %v466 = vpop.f32.mrf.mxu0
    %v467 = vadd.f32 %v267, %v466
    %v468 = vpop.f32.mrf.mxu0
    %v469 = vpop.f32.mrf.mxu0
    %470 = vdwg.mxu0
    %v471 = vmax.f32 %v465, 0.0
    %v472 = vmax.f32 %v467, 0.0
    %v473 = vpack.c.bf16 %v471, %v471
    %v474 = vpack.c.bf16 %v472, %v472
    %v475 = vld [vmem:[#allocation7] sm:$0xf]
    %v476 = vld [vmem:[#allocation7 + $0x4] sm:$0xf]
    %v477 = vld [vmem:[#allocation7 + $0x8] sm:$0xf]
    %v478 = vld [vmem:[#allocation7 + $0xc] sm:$0xf]
    %v479 = vld [vmem:[#allocation7 + $0x10] sm:$0xf]
    %v480 = vld [vmem:[#allocation7 + $0x14] sm:$0xf]
    %v481 = vld [vmem:[#allocation7 + $0x18] sm:$0xf]
    %v482 = vld [vmem:[#allocation7 + $0x1c] sm:$0xf]
    %v483 = vld [vmem:[#allocation7 + $0x20] sm:$0xf]
    %v484 = vld [vmem:[#allocation7 + $0x24] sm:$0xf]
    %v485 = vld [vmem:[#allocation7 + $0x28] sm:$0xf]
    %v486 = vld [vmem:[#allocation7 + $0x2c] sm:$0xf]
    %v487 = vld [vmem:[#allocation7 + $0x30] sm:$0xf]
    %v488 = vld [vmem:[#allocation7 + $0x34] sm:$0xf]
    %v489 = vld [vmem:[#allocation7 + $0x38] sm:$0xf]
    %v490 = vld [vmem:[#allocation7 + $0x3c] sm:$0xf]
    %v491 = vld [vmem:[#allocation7 + $0x40] sm:$0xf]
    %v492 = vld [vmem:[#allocation7 + $0x44] sm:$0xf]
    %v493 = vld [vmem:[#allocation7 + $0x48] sm:$0xf]
    %v494 = vld [vmem:[#allocation7 + $0x4c] sm:$0xf]
    %v495 = vld [vmem:[#allocation7 + $0x50] sm:$0xf]
    %v496 = vld [vmem:[#allocation7 + $0x54] sm:$0xf]
    %v497 = vld [vmem:[#allocation7 + $0x58] sm:$0xf]
    %v498 = vld [vmem:[#allocation7 + $0x5c] sm:$0xf]
    %v499 = vld [vmem:[#allocation7 + $0x60] sm:$0xf]
    %v500 = vld [vmem:[#allocation7 + $0x64] sm:$0xf]
    %v501 = vld [vmem:[#allocation7 + $0x68] sm:$0xf]
    %v502 = vld [vmem:[#allocation7 + $0x6c] sm:$0xf]
    %v503 = vld [vmem:[#allocation7 + $0x70] sm:$0xf]
    %v504 = vld [vmem:[#allocation7 + $0x74] sm:$0xf]
    %v505 = vld [vmem:[#allocation7 + $0x78] sm:$0xf]
    %v506 = vld [vmem:[#allocation7 + $0x7c] sm:$0xf]
    %v507 = vld [vmem:[%s6] sm:$0x1]
    %v509 = vlaneseq
    %v510 = vshrl.u32 %v509, 7
    %v511 = vsub.s32 0, %v510
    %v512 = vrot.slane %v507, %v511
    %v546 = vunpack.c.l.b16 %v475
    %v547 = vunpack.c.l.b16 %v476
    %v548 = vunpack.c.l.b16 %v477
    %v549 = vunpack.c.l.b16 %v478
    %v550 = vunpack.c.l.b16 %v479
    %v551 = vunpack.c.l.b16 %v480
    %v552 = vunpack.c.l.b16 %v481
    %v553 = vunpack.c.l.b16 %v482
    %v554 = vunpack.c.l.b16 %v483
    %v555 = vunpack.c.l.b16 %v484
    %v556 = vunpack.c.l.b16 %v485
    %v557 = vunpack.c.l.b16 %v486
    %v558 = vunpack.c.l.b16 %v487
    %v559 = vunpack.c.l.b16 %v488
    %v560 = vunpack.c.l.b16 %v489
    %v561 = vunpack.c.l.b16 %v490
    %v562 = vunpack.c.l.b16 %v491
    %v563 = vunpack.c.l.b16 %v492
    %v564 = vunpack.c.l.b16 %v493
    %v565 = vunpack.c.l.b16 %v494
    %v566 = vunpack.c.l.b16 %v495
    %v567 = vunpack.c.l.b16 %v496
    %v568 = vunpack.c.l.b16 %v497
    %v569 = vunpack.c.l.b16 %v498
    %v570 = vunpack.c.l.b16 %v499
    %v571 = vunpack.c.l.b16 %v500
    %v572 = vunpack.c.l.b16 %v501
    %v573 = vunpack.c.l.b16 %v502
    %v574 = vunpack.c.l.b16 %v503
    %v575 = vunpack.c.l.b16 %v504
    %v576 = vunpack.c.l.b16 %v505
    %v577 = vunpack.c.l.b16 %v506
    %v578 = vpack.c.b16 %v547, %v546
    %v579 = vpack.c.b16 %v549, %v548
    %v580 = vpack.c.b16 %v551, %v550
    %v581 = vpack.c.b16 %v553, %v552
    %v582 = vpack.c.b16 %v555, %v554
    %v583 = vpack.c.b16 %v557, %v556
    %v584 = vpack.c.b16 %v559, %v558
    %v585 = vpack.c.b16 %v561, %v560
    %v586 = vpack.c.b16 %v563, %v562
    %v587 = vpack.c.b16 %v565, %v564
    %v588 = vpack.c.b16 %v567, %v566
    %v589 = vpack.c.b16 %v569, %v568
    %v590 = vpack.c.b16 %v571, %v570
    %v591 = vpack.c.b16 %v573, %v572
    %v592 = vpack.c.b16 %v575, %v574
    %v593 = vpack.c.b16 %v577, %v576
    %610 = vmatprep.subr.bf16.mxu0 0
    %611 = vmatpush1.bf16.msra.mxu0 %v585
    %612 = vmatprep.subr.bf16.mxu0 0
    %613 = vmatpush1.bf16.msra.mxu0 %v584
    %614 = vmatprep.subr.bf16.mxu0 0
    %615 = vmatpush1.bf16.msra.mxu0 %v583
    %616 = vmatprep.subr.bf16.mxu0 0
    %617 = vmatpush1.bf16.msra.mxu0 %v582
    %618 = vmatprep.subr.bf16.mxu0 0
    %619 = vmatpush1.bf16.msra.mxu0 %v581
    %620 = vmatprep.subr.bf16.mxu0 0
    %621 = vmatpush1.bf16.msra.mxu0 %v580
    %622 = vmatprep.subr.bf16.mxu0 0
    %623 = vmatpush1.bf16.msra.mxu0 %v579
    %624 = vmatprep.subr.bf16.mxu0 0
    %625 = vmatpush1.bf16.msra.mxu0 %v578
    %626 = vmatprep.subr.bf16.mxu0 0
    %627 = vmatpush2.bf16.msra.mxu0 %v593
    %628 = vmatprep.subr.bf16.mxu0 0
    %629 = vmatpush2.bf16.msra.mxu0 %v592
    %630 = vmatprep.subr.bf16.mxu0 0
    %631 = vmatpush2.bf16.msra.mxu0 %v591
    %632 = vmatprep.subr.bf16.mxu0 0
    %633 = vmatpush2.bf16.msra.mxu0 %v590
    %634 = vmatprep.subr.bf16.mxu0 0
    %635 = vmatpush2.bf16.msra.mxu0 %v589
    %636 = vmatprep.subr.bf16.mxu0 0
    %637 = vmatpush2.bf16.msra.mxu0 %v588
    %638 = vmatprep.subr.bf16.mxu0 0
    %639 = vmatpush2.bf16.msra.mxu0 %v587
    %640 = vmatprep.subr.bf16.mxu0 0
    %641 = vmatpush2.bf16.msra.mxu0 %v586
    %642 = vmatprep.mubr.bf16.mxu0 %v474
    %643 = vmatmul.mubr.bf16.gmra.mxu0 %v473
    %v644 = vpop.f32.mrf.mxu0
    %v645 = vadd.f32 %v512, %v644
    %v646 = vpop.f32.mrf.mxu0
    %v647 = vpop.f32.mrf.mxu0
    %v648 = vpop.f32.mrf.mxu0
    %649 = vdwg.mxu0
    %v650 = vmax.f32 %v645, 0.0
    %v651 = vpack.c.bf16 %v650, %v650
    %v652 = vld [vmem:[%s7] sm:$0xf]
    %v653 = vld [vmem:[%s7 + $0x4] sm:$0xf]
    %v654 = vld [vmem:[%s7 + $0x8] sm:$0xf]
    %v655 = vld [vmem:[%s7 + $0xc] sm:$0xf]
    %v656 = vld [vmem:[%s7 + $0x10] sm:$0xf]
    %v657 = vld [vmem:[%s7 + $0x14] sm:$0xf]
    %v658 = vld [vmem:[%s7 + $0x18] sm:$0xf]
    %v659 = vld [vmem:[%s7 + $0x1c] sm:$0xf]
    %v660 = vld [vmem:[%s7 + $0x20] sm:$0xf]
    %v661 = vld [vmem:[%s7 + $0x24] sm:$0xf]
    %v662 = vld [vmem:[%s7 + $0x28] sm:$0xf]
    %v663 = vld [vmem:[%s7 + $0x2c] sm:$0xf]
    %v664 = vld [vmem:[%s7 + $0x30] sm:$0xf]
    %v665 = vld [vmem:[%s7 + $0x34] sm:$0xf]
    %v666 = vld [vmem:[%s7 + $0x38] sm:$0xf]
    %v667 = vld [vmem:[%s7 + $0x3c] sm:$0xf]
    %v668 = vld [vmem:[%s8] sm:$0x1]
    %v670 = vlaneseq
    %v671 = vshrl.u32 %v670, 7
    %v672 = vsub.s32 0, %v671
    %v673 = vrot.slane %v668, %v672
    %v691 = vunpack.c.l.b16 %v652
    %v692 = vunpack.c.l.b16 %v653
    %v693 = vunpack.c.l.b16 %v654
    %v694 = vunpack.c.l.b16 %v655
    %v695 = vunpack.c.l.b16 %v656
    %v696 = vunpack.c.l.b16 %v657
    %v697 = vunpack.c.l.b16 %v658
    %v698 = vunpack.c.l.b16 %v659
    %v699 = vunpack.c.l.b16 %v660
    %v700 = vunpack.c.l.b16 %v661
    %v701 = vunpack.c.l.b16 %v662
    %v702 = vunpack.c.l.b16 %v663
    %v703 = vunpack.c.l.b16 %v664
    %v704 = vunpack.c.l.b16 %v665
    %v705 = vunpack.c.l.b16 %v666
    %v706 = vunpack.c.l.b16 %v667
    %v707 = vpack.c.b16 %v692, %v691
    %v708 = vpack.c.b16 %v694, %v693
    %v709 = vpack.c.b16 %v696, %v695
    %v710 = vpack.c.b16 %v698, %v697
    %v711 = vpack.c.b16 %v700, %v699
    %v712 = vpack.c.b16 %v702, %v701
    %v713 = vpack.c.b16 %v704, %v703
    %v714 = vpack.c.b16 %v706, %v705
    %723 = vmatprep.subr.bf16.mxu0 0
    %724 = vmatpush1.bf16.msra.mxu0 %v714
    %725 = vmatprep.subr.bf16.mxu0 0
    %726 = vmatpush1.bf16.msra.mxu0 %v713
    %727 = vmatprep.subr.bf16.mxu0 0
    %728 = vmatpush1.bf16.msra.mxu0 %v712
    %729 = vmatprep.subr.bf16.mxu0 0
    %730 = vmatpush1.bf16.msra.mxu0 %v711
    %731 = vmatprep.subr.bf16.mxu0 0
    %732 = vmatpush1.bf16.msra.mxu0 %v710
    %733 = vmatprep.subr.bf16.mxu0 0
    %734 = vmatpush1.bf16.msra.mxu0 %v709
    %735 = vmatprep.subr.bf16.mxu0 0
    %736 = vmatpush1.bf16.msra.mxu0 %v708
    %737 = vmatprep.subr.bf16.mxu0 0
    %738 = vmatpush1.bf16.msra.mxu0 %v707
    %739 = vmatprep.subr.bf16.mxu0 0
    %740 = vmatpush2.bf16.msra.mxu0 0
    %741 = vmatprep.subr.bf16.mxu0 0
    %742 = vmatpush2.bf16.msra.mxu0 0
    %743 = vmatprep.subr.bf16.mxu0 0
    %744 = vmatpush2.bf16.msra.mxu0 0
    %745 = vmatprep.subr.bf16.mxu0 0
    %746 = vmatpush2.bf16.msra.mxu0 0
    %747 = vmatprep.subr.bf16.mxu0 0
    %748 = vmatpush2.bf16.msra.mxu0 0
    %749 = vmatprep.subr.bf16.mxu0 0
    %750 = vmatpush2.bf16.msra.mxu0 0
    %751 = vmatprep.subr.bf16.mxu0 0
    %752 = vmatpush2.bf16.msra.mxu0 0
    %753 = vmatprep.subr.bf16.mxu0 0
    %754 = vmatpush2.bf16.msra.mxu0 0
    %755 = vmatprep.mubr.bf16.mxu0 0
    %756 = vmatmul.mubr.bf16.gmra.mxu0 %v651
    %v757 = vpop.f32.mrf.mxu0
    %v758 = vadd.f32 %v673, %v757
    %v759 = vpop.f32.mrf.mxu0
    %v760 = vpop.f32.mrf.mxu0
    %v761 = vpop.f32.mrf.mxu0
    %762 = vdwg.mxu0
    %vm763 = vcmask 154624
    %764 = vst.msk [vmem:[#allocation8] sm:$0xff] %vm763, %v758
    // Predicated region
    $region50: #{_bc_mlp_call.1} parent=1 // pred_check
      _
    $region51: #{_bc_mlp_call.1} parent=1 // pred_check_branch
      %766 = sbr.rel (0) target = $region53
    $region52: #{_bc_mlp_call.1} parent=1 // pred_region
      %s768 = ssub.s32 128, 128
      %769 = vsyncadd [#allocation4], %s768
      %s771 = sshll.u32 [#allocation8], 4
      %s772 = int_to_ptr.vmem [resolvable:$true] %s771
      %774 = dma.vmem_to_hbm [thread:$0]  %s772, 128, %s9, [#allocation4]
    $region53: #{_bc_mlp_call.1} parent=1 // pred_fallthru
      _
    // Predicated region
    $region54: #{_bc_mlp_call.1} parent=1 // pred_check
      _
    $region55: #{_bc_mlp_call.1} parent=1 // pred_check_branch
      %776 = sbr.rel (0) target = $region57
    $region56: #{_bc_mlp_call.1} parent=1 // pred_region
      %777 = dma.done [#allocation4], 128
    $region57: #{_bc_mlp_call.1} parent=1 // pred_fallthru
      _
    %778 = vsyncpa [#allocation3], 1
    %779 = vsyncpa [#allocation6], 1
    %780 = vsyncpa [#allocation4], 1

</llo_original>
